<compile_context>
chip_gen: v6e
topology: v6e:2x2x1
jax: 0.10.0
libtpu: 0.0.40
codegen_flags: <defaults>
</compile_context>

<pallas_src>
import functools

import jax
import jax.numpy as jnp
from jax import lax
from jax.experimental import pallas as pl
from jax.experimental.pallas import tpu as pltpu

EPS = 1e-5
_MIB = 1024 * 1024
_HEADROOM = 4 * _MIB


def _round_up(x, m):
    return ((x + m - 1) // m) * m


def _tpu_vmem_bytes():
    try:
        return int(pltpu.get_tpu_info().vmem_capacity_bytes)
    except Exception:
        return 64 * _MIB   # conservative fallback (v7x per-TensorCore VMEM)


# ---------------------------------------------------------------------------
# Kernel 1 (main path): fused per-batch GroupNorm(1 group) + conditional
# scale/shift.  Block = (bt, C, T_pad) resident in VMEM; fori_loop over the
# batch-tile axis bounds f32 temporaries to one (C, T_pad) slab.
# ---------------------------------------------------------------------------
def _fused_norm_kernel(x_ref, cond_ref, o_ref, *, n_valid, pad_elems, unroll):
    bt = x_ref.shape[0]
    inv_n = 1.0 / n_valid

    def body(i, carry):
        # Pass 1: mean (re-read x_ref, per-use cast).
        s = jnp.sum(x_ref[i].astype(jnp.float32), axis=(0, 1), keepdims=True)
        mean = s * inv_n                                              # (1, 1)
        # Pass 2: centered variance.  Zero-padded tail columns each contribute
        # exactly mean^2; subtract that correction so padding is exact.
        d = x_ref[i].astype(jnp.float32) - mean                       # (C, T_pad)
        ssd = (jnp.sum(d * d, axis=(0, 1), keepdims=True)
               - pad_elems * (mean * mean))
        inv = lax.rsqrt(jnp.maximum(ssd * inv_n, 0.0) + EPS)          # (1, 1)

        cond = cond_ref[i].astype(jnp.float32)                        # (C, 2)
        scale = cond[:, 0:1] * inv                                    # gamma * inv
        beta = cond[:, 1:2]
        o_ref[i] = (d * scale + beta).astype(o_ref.dtype)             # (C, T_pad)
        return carry

    lax.fori_loop(0, bt, body, 0, unroll=unroll)


# ---------------------------------------------------------------------------
# Kernels 2+3 (large-slab path): T-tiled stats pass then T-tiled apply pass.
# ---------------------------------------------------------------------------
def _stats_kernel(x_ref, o_ref):
    # grid = (B, T_tiles); o_ref (1, 1, 128) is revisited across the T axis and
    # accumulates [sum, sum_sq] in lanes 0 / 1.
    @pl.when(pl.program_id(1) == 0)
    def _():
        o_ref[...] = jnp.zeros_like(o_ref)

    x = x_ref[...].astype(jnp.float32)                      # (1, C, tt)
    ps = jnp.sum(x, axis=(1, 2), keepdims=True)             # (1, 1, 1)
    pss = jnp.sum(x * x, axis=(1, 2), keepdims=True)        # (1, 1, 1)
    lane = lax.broadcasted_iota(jnp.int32, o_ref.shape, 2)
    o_ref[...] += (jnp.where(lane == 0, ps, 0.0)
                   + jnp.where(lane == 1, pss, 0.0))


def _apply_kernel(x_ref, cond_ref, o_ref):
    cond = cond_ref[...].astype(jnp.float32)                # (1, C, 2) [scale|shift]
    o_ref[...] = (x_ref[...].astype(jnp.float32) * cond[:, :, 0:1]
                  + cond[:, :, 1:2]).astype(o_ref.dtype)


# ---------------------------------------------------------------------------
# Wrappers
# ---------------------------------------------------------------------------
def _single_pass(x, gamma, beta, B, C, T, T_pad, per_native, per_f32, avail, cap):
    # Largest batch tile that fits VMEM (double-buffered in/out + f32 temps),
    # capped so the grid keeps >= ~4 steps when B allows.
    bt_fit = max(1, (avail - _HEADROOM - 3 * per_f32) // (4 * per_native))
    bt_steps = max(1, B // min(4, B))
    bt = int(max(1, min(bt_fit, bt_steps, B)))

    B_pad = _round_up(B, bt)
    cond = jnp.stack([gamma, beta], axis=-1)                          # (B, C, 2)
    padded = (B_pad != B) or (T_pad != T)
    if padded:
        x = jnp.pad(x, ((0, B_pad - B), (0, 0), (0, T_pad - T)))
        cond = jnp.pad(cond, ((0, B_pad - B), (0, 0), (0, 0)))

    vmem_limit = int(min(cap, max(32 * _MIB,
                                  4 * bt * per_native + 3 * per_f32 + _HEADROOM)))
    kernel = functools.partial(
        _fused_norm_kernel,
        n_valid=float(C * T),
        pad_elems=float(C * (T_pad - T)),
        unroll=bool(bt <= 8))

    out = pl.pallas_call(
        kernel,
        out_shape=jax.ShapeDtypeStruct((B_pad, C, T_pad), x.dtype),
        grid_spec=pltpu.PrefetchScalarGridSpec(
            num_scalar_prefetch=0,
            grid=(B_pad // bt,),
            in_specs=[
                pl.BlockSpec((bt, C, T_pad), lambda i: (i, 0, 0)),    # x
                pl.BlockSpec((bt, C, 2), lambda i: (i, 0, 0)),        # [gamma|beta]
            ],
            out_specs=pl.BlockSpec((bt, C, T_pad), lambda i: (i, 0, 0)),
        ),
        compiler_params=pltpu.CompilerParams(
            dimension_semantics=("parallel",),
            vmem_limit_bytes=vmem_limit),
    )(x, cond)

    if padded:
        out = out[:B, :, :T]
    return out


def _two_phase(x, gamma, beta, B, C, T, itemsize, avail, cap):
    # Per-batch slab too big for one VMEM block (notably v7x's 64 MiB VMEM):
    # T-tiled stats pass + T-tiled apply pass.  x is read from HBM twice.
    tt = max(128, ((avail - _HEADROOM) // (C * (4 * itemsize + 8))) // 128 * 128)
    tt = min(tt, _round_up(T, 128))
    T_pad = _round_up(T, tt)
    t_tiles = T_pad // tt

    if T_pad != T:
        x = jnp.pad(x, ((0, 0), (0, 0), (0, T_pad - T)))   # zero pad: exact for s/ss

    tile_native = C * tt * itemsize
    tile_f32 = C * tt * 4
    stats_limit = int(min(cap, max(32 * _MIB,
                                   2 * tile_native + 2 * tile_f32 + _HEADROOM)))
    apply_limit = int(min(cap, max(32 * _MIB,
                                   4 * tile_native + 2 * tile_f32 + _HEADROOM)))

    stats = pl.pallas_call(
        _stats_kernel,
        out_shape=jax.ShapeDtypeStruct((B, 1, 128), jnp.float32),
        grid_spec=pltpu.PrefetchScalarGridSpec(
            num_scalar_prefetch=0,
            grid=(B, t_tiles),
            in_specs=[pl.BlockSpec((1, C, tt), lambda b, t: (b, 0, t))],
            out_specs=pl.BlockSpec((1, 1, 128), lambda b, t: (b, 0, 0)),
        ),
        compiler_params=pltpu.CompilerParams(
            dimension_semantics=("parallel", "arbitrary"),
            vmem_limit_bytes=stats_limit),
    )(x)

    # TODO(synk): single-pass E[x^2]-mean^2 can lose precision when |mean|>>std over
    # very long sequences; a compensated / two-pass stats variant would fix it.
    n = float(C * T)
    mean = stats[:, 0, 0] / n                                         # (B,)
    var = jnp.maximum(stats[:, 0, 1] / n - mean * mean, 0.0)
    inv = lax.rsqrt(var + EPS)
    scale = gamma * inv[:, None]                                      # (B, C)
    shift = beta - mean[:, None] * scale
    cond = jnp.stack([scale, shift], axis=-1)                         # (B, C, 2)

    out = pl.pallas_call(
        _apply_kernel,
        out_shape=jax.ShapeDtypeStruct((B, C, T_pad), x.dtype),
        grid_spec=pltpu.PrefetchScalarGridSpec(
            num_scalar_prefetch=0,
            grid=(B, t_tiles),
            in_specs=[pl.BlockSpec((1, C, tt), lambda b, t: (b, 0, t)),
                      pl.BlockSpec((1, C, 2), lambda b, t: (b, 0, 0))],
            out_specs=pl.BlockSpec((1, C, tt), lambda b, t: (b, 0, t)),
        ),
        compiler_params=pltpu.CompilerParams(
            dimension_semantics=("parallel", "parallel"),
            vmem_limit_bytes=apply_limit),
    )(x, cond)

    return out[:, :, :T] if T_pad != T else out


def conditional_norm(x_bct, condition_embedding, weight, bias):
    """ConditionalNorm forward (base_norm_type='time_group_norm').

    x_bct: (B, C, T); condition_embedding: (B, D);
    weight: (2C, D) torch nn.Linear layout; bias: (2C,).
    Returns y with shape (B, C, T) and x's dtype.
    """
    B, C, T = x_bct.shape
    itemsize = jnp.dtype(x_bct.dtype).itemsize

    # Hoisted conditioning linear (tiny): (B, D) @ (D, 2C) + b.
    gb = (condition_embedding.astype(jnp.float32)
          @ jnp.transpose(weight).astype(jnp.float32)
          + bias.astype(jnp.float32))                                 # (B, 2C)
    gamma = gb[:, :C]
    beta = gb[:, C:]

    vmem_cap = _tpu_vmem_bytes()
    avail = (vmem_cap * 7) // 10      # budget for blocks + in-kernel temporaries
    cap = (vmem_cap * 3) // 4         # hard cap handed to the compiler

    T128 = _round_up(T, 128)          # lane-dense blocks
    per_native = C * T128 * itemsize  # one batch element, input dtype
    per_f32 = C * T128 * 4            # one batch element, f32 temporaries

    # TODO(synk): route tiny problems (< ~1 MiB) to the plain-XLA expression;
    # kept on the Pallas path here so this script always exercises the kernel.
    if 4 * per_native + 3 * per_f32 + _HEADROOM <= avail:
        return _single_pass(x_bct, gamma, beta, B, C, T, T128,
                            per_native, per_f32, avail, cap)
    return _two_phase(x_bct, gamma, beta, B, C, T, itemsize, avail, cap)


def _reference(x_bct, cond_emb, weight, bias):
    # Pure-JAX reference of the PyTorch forward.
    mean = jnp.mean(x_bct, axis=(1, 2), keepdims=True)
    var = jnp.mean((x_bct - mean) ** 2, axis=(1, 2), keepdims=True)
    xn = (x_bct - mean) / jnp.sqrt(var + EPS)
    gb = cond_emb @ weight.T + bias
    C = x_bct.shape[1]
    return gb[:, :C][:, :, None] * xn + gb[:, C:][:, :, None]


if __name__ == "__main__":
    key = jax.random.PRNGKey(0)

    # Primary small test: B=2, C=8 (norm_dim), T=128, D=32 (condition_dim).
    B, C, T, D = 2, 8, 128, 32
    kx, kc, kw = jax.random.split(key, 3)
    x = jax.random.normal(kx, (B, C, T), dtype=jnp.float32)
    cond_emb = jax.random.normal(kc, (B, D), dtype=jnp.float32)
    weight = 0.1 * jax.random.normal(kw, (2 * C, D), dtype=jnp.float32)
    # reset_parameters(): bias[:C] = 1 (gamma), bias[C:] = 0 (beta)
    bias = jnp.concatenate([jnp.ones((C,), jnp.float32),
                            jnp.zeros((C,), jnp.float32)])

    y = jax.block_until_ready(conditional_norm(x, cond_emb, weight, bias))
    y_ref = _reference(x, cond_emb, weight, bias)
    assert y.shape == (B, C, T)
    assert jnp.allclose(y, y_ref, atol=1e-4, rtol=1e-4), "mismatch vs reference"

    # Ragged shapes: exercise T->128 padding + pad-corrected variance + B pad.
    B2, C2, T2 = 3, 6, 100
    kx2, kc2 = jax.random.split(kx, 2)
    x2 = 3.0 + jax.random.normal(kx2, (B2, C2, T2), dtype=jnp.float32)
    cond2 = jax.random.normal(kc2, (B2, D), dtype=jnp.float32)
    w2 = 0.1 * jax.random.normal(kw, (2 * C2, D), dtype=jnp.float32)
    b2 = jnp.concatenate([jnp.ones((C2,), jnp.float32),
                          jnp.zeros((C2,), jnp.float32)])
    y2 = jax.block_until_ready(conditional_norm(x2, cond2, w2, b2))
    assert jnp.allclose(y2, _reference(x2, cond2, w2, b2), atol=1e-4, rtol=1e-4), \
        "ragged-shape mismatch vs reference"

    print("KERNEL_OK")
</pallas_src>

<mosaic_0001>
module attributes {stable_mosaic.version = 11 : i64} {
  func.func @_fused_norm_kernel(%arg0: i32, %arg1: memref<1x8x128xf32, #tpu.memory_space<vmem>>, %arg2: memref<1x8x2xf32, #tpu.memory_space<vmem>>, %arg3: memref<1x8x128xf32, #tpu.memory_space<vmem>>) attributes {dimension_semantics = [#tpu.dimension_semantics<parallel>], iteration_bounds = array<i64: 2>, scalar_prefetch = 0 : i64, scratch_operands = 0 : i64, tpu.core_type = #tpu.core_type<tc>, window_params = [{transform_indices = @transform_0, window_bounds = array<i64: 1, 8, 128>}, {transform_indices = @transform_1, window_bounds = array<i64: 1, 8, 2>}, {transform_indices = @transform_2, window_bounds = array<i64: 1, 8, 128>}]} {
    %c0_i32 = arith.constant 0 : i32
    %0 = arith.index_cast %c0_i32 : i32 to index
    %c0 = arith.constant 0 : index
    %c0_0 = arith.constant 0 : index
    %1 = vector.load %arg1[%0, %c0, %c0_0] : memref<1x8x128xf32, #tpu.memory_space<vmem>>, vector<1x8x128xf32>
    %2 = vector.shape_cast %1 : vector<1x8x128xf32> to vector<8x128xf32>
    %3 = vector.shape_cast %2 : vector<8x128xf32> to vector<1x8x128xf32>
    %cst = arith.constant dense<0.000000e+00> : vector<1xf32>
    %4 = vector.multi_reduction <add>, %3, %cst [1, 2] : vector<1x8x128xf32> to vector<1xf32>
    %5 = vector.shape_cast %4 : vector<1xf32> to vector<1x1x1xf32>
    %6 = vector.extract %5[0, 0, 0] : f32 from vector<1x1x1xf32>
    %7 = vector.broadcast %6 : f32 to vector<1x1xf32>
    %cst_1 = arith.constant 9.765625E-4 : f32
    %8 = vector.broadcast %cst_1 : f32 to vector<1x1xf32>
    %9 = arith.mulf %7, %8 : vector<1x1xf32>
    %10 = arith.index_cast %c0_i32 : i32 to index
    %c0_2 = arith.constant 0 : index
    %c0_3 = arith.constant 0 : index
    %11 = vector.load %arg1[%10, %c0_2, %c0_3] : memref<1x8x128xf32, #tpu.memory_space<vmem>>, vector<1x8x128xf32>
    %12 = vector.shape_cast %11 : vector<1x8x128xf32> to vector<8x128xf32>
    %13 = vector.broadcast %9 : vector<1x1xf32> to vector<8x128xf32>
    %14 = arith.subf %12, %13 : vector<8x128xf32>
    %15 = arith.mulf %14, %14 : vector<8x128xf32>
    %16 = vector.shape_cast %15 : vector<8x128xf32> to vector<1x8x128xf32>
    %cst_4 = arith.constant dense<0.000000e+00> : vector<1xf32>
    %17 = vector.multi_reduction <add>, %16, %cst_4 [1, 2] : vector<1x8x128xf32> to vector<1xf32>
    %18 = vector.shape_cast %17 : vector<1xf32> to vector<1x1x1xf32>
    %19 = vector.extract %18[0, 0, 0] : f32 from vector<1x1x1xf32>
    %20 = vector.broadcast %19 : f32 to vector<1x1xf32>
    %21 = arith.mulf %9, %9 : vector<1x1xf32>
    %cst_5 = arith.constant 0.000000e+00 : f32
    %22 = vector.broadcast %cst_5 : f32 to vector<1x1xf32>
    %23 = arith.mulf %22, %21 : vector<1x1xf32>
    %24 = arith.subf %20, %23 : vector<1x1xf32>
    %cst_6 = arith.constant 9.765625E-4 : f32
    %25 = vector.broadcast %cst_6 : f32 to vector<1x1xf32>
    %26 = arith.mulf %24, %25 : vector<1x1xf32>
    %cst_7 = arith.constant 0.000000e+00 : f32
    %27 = vector.broadcast %cst_7 : f32 to vector<1x1xf32>
    %28 = arith.maximumf %26, %27 : vector<1x1xf32>
    %cst_8 = arith.constant 9.99999974E-6 : f32
    %29 = vector.broadcast %cst_8 : f32 to vector<1x1xf32>
    %30 = arith.addf %28, %29 : vector<1x1xf32>
    %31 = math.rsqrt %30 : vector<1x1xf32>
    %32 = arith.index_cast %c0_i32 : i32 to index
    %c0_9 = arith.constant 0 : index
    %c0_10 = arith.constant 0 : index
    %33 = vector.load %arg2[%32, %c0_9, %c0_10] : memref<1x8x2xf32, #tpu.memory_space<vmem>>, vector<1x8x2xf32>
    %34 = vector.shape_cast %33 : vector<1x8x2xf32> to vector<8x2xf32>
    %35 = vector.extract_strided_slice %34 {offsets = [0, 0], sizes = [8, 1], strides = [1, 1]} : vector<8x2xf32> to vector<8x1xf32>
    %36 = vector.broadcast %31 : vector<1x1xf32> to vector<8x1xf32>
    %37 = arith.mulf %35, %36 : vector<8x1xf32>
    %38 = vector.extract_strided_slice %34 {offsets = [0, 1], sizes = [8, 1], strides = [1, 1]} : vector<8x2xf32> to vector<8x1xf32>
    %39 = vector.broadcast %37 : vector<8x1xf32> to vector<8x128xf32>
    %40 = arith.mulf %14, %39 : vector<8x128xf32>
    %41 = vector.broadcast %38 : vector<8x1xf32> to vector<8x128xf32>
    %42 = arith.addf %40, %41 : vector<8x128xf32>
    %43 = arith.index_cast %c0_i32 : i32 to index
    %c0_11 = arith.constant 0 : index
    %c0_12 = arith.constant 0 : index
    %44 = vector.load %arg3[%43, %c0_11, %c0_12] : memref<1x8x128xf32, #tpu.memory_space<vmem>>, vector<1x8x128xf32>
    %45 = vector.shape_cast %44 : vector<1x8x128xf32> to vector<8x128xf32>
    %46 = vector.shape_cast %42 : vector<8x128xf32> to vector<1x8x128xf32>
    tpu.vector_store %arg3[%43, %c0_11, %c0_12], %46 {strides = array<i32>} : memref<1x8x128xf32, #tpu.memory_space<vmem>>, vector<1x8x128xf32>,
    %c1_i32 = arith.constant 1 : i32
    return
  }
  func.func @transform_0(%arg0: i32) -> (i32, i32, i32) {
    %c0_i32 = arith.constant 0 : i32
    %c0_i32_0 = arith.constant 0 : i32
    %c0_i32_1 = arith.constant 0 : i32
    return %arg0, %c0_i32, %c0_i32_0 : i32, i32, i32
  }
  func.func @transform_1(%arg0: i32) -> (i32, i32, i32) {
    %c0_i32 = arith.constant 0 : i32
    %c0_i32_0 = arith.constant 0 : i32
    %c0_i32_1 = arith.constant 0 : i32
    return %arg0, %c0_i32, %c0_i32_0 : i32, i32, i32
  }
  func.func @transform_2(%arg0: i32) -> (i32, i32, i32) {
    %c0_i32 = arith.constant 0 : i32
    %c0_i32_0 = arith.constant 0 : i32
    %c0_i32_1 = arith.constant 0 : i32
    return %arg0, %c0_i32, %c0_i32_0 : i32, i32, i32
  }
}

</mosaic_0001>

<llo_original>
// kernel: tpu_custom_call.1
$region0: #{tpu_custom_call.1}
  #allocation0 [shape = 'u32[]', space=smem, size = 0x4, offset = 0x4, fixed_abs, tag = 'smem constant byte address 0x4 - core index']
  #allocation1 [shape = 'u32[144,128]{1,0:T(1,128)}', space=vmem, size = 0x12000, scoped, tag = 'internal scratch']
  %s0 = inlined_call_operand.vmem [shape: f32[2,8,128], index: 0, kind: input, shape index: {}]
  %s1 = inlined_call_operand.vmem [shape: f32[2,8,2], index: 1, kind: input, shape index: {}]
  %s2 = inlined_call_operand.hbm [shape: f32[2,8,128], index: 2, kind: output, shape index: {}]
  %s3 = sld [smem:[#allocation0]]
  $region41: #{tpu_custom_call.1} parent=0
    _
  %s5 = ssub.s32 1, %s3
  %s6 = scalar_select 0, %s5, %s3
  $region1: #{tpu_custom_call.1} parent=0
    #allocation2 [shape = 'u8[8192]{0}', space=vmem, size = 0x2000, scoped, tag = 'output window, operand 0']
    #allocation3 [shape = 's32[2]{0}', space=sflag, size = 0x8, scoped, tag = 'scoped memory for tpu_custom_call.1']
    %7 = vsyncpa [#allocation3], 0
    %s8 = scalar_lea.sflag [#allocation3], 1
    %9 = vsyncpa %s8, 0
    loop: start=0, step=1, limit=4
    $region2: #{tpu_custom_call.1} parent=1 // loop_pre_header
      _
    $region3: #{tpu_custom_call.1} parent=1 // loop_header
      %s11 = sphi 0, %s15
      %p12 = scmp.ge.s32.totalorder %s11, 4
      %s21 = sphi 0, %s23
      %s24 = sphi 0, %s21
      %s25 = sphi 0, %s24
      %s41 = sphi 0, %s25
      %s47 = sphi 0, %s49
      %s50 = sphi 0, %s47
      %s51 = sphi 0, %s50
      %s67 = sphi 0, %s51
      %s73 = sphi 0, %s75
      %s76 = sphi 0, %s73
      %s77 = sphi 0, %s76
      %s93 = sphi 0, %s77
    $region4: #{tpu_custom_call.1} parent=1 // loop_header_branch
      %14 = sbr.rel (%p12) target = $region8
    $region5: #{tpu_custom_call.1} parent=1 // loop_body
      %s16 = ssub.s32 %s11, 1
      %s17 = ssub.s32 %s11, 2
      %s18 = sadd.s32 %s11, 1
      %s19 = ssub.s32 %s11, %s18
      %p20 = scmp.eq.s32.totalorder %s19, 0
      %s22 = sadd.s32 %s21, 1
      %s23 = scalar_select %p20, %s21, %s22
      %p26 = pneg %p20
      %p27 = scmp.eq.s32.totalorder %s11, 1
      %p28 = por %p26, %p27
      %p29 = scmp.ne.s32.totalorder %s21, %s24
      %p30 = scmp.eq.s32.totalorder %s11, 0
      %p31 = por %p29, %p30
      %p32 = scmp.ne.s32.totalorder %s21, %s24
      %p33 = scmp.eq.s32.totalorder %s16, 1
      %p34 = por %p32, %p33
      %p35 = scmp.ne.s32.totalorder %s24, %s25
      %p36 = scmp.eq.s32.totalorder %s16, 0
      %p37 = por %p35, %p36
      %p38 = scmp.ne.s32.totalorder %s24, %s25
      %p39 = scmp.eq.s32.totalorder %s17, 1
      %p40 = por %p38, %p39
      %p42 = scmp.ne.s32.totalorder %s25, %s41
      %p43 = scmp.eq.s32.totalorder %s17, 0
      %p44 = por %p42, %p43
      %s45 = ssub.s32 %s11, %s18
      %p46 = scmp.eq.s32.totalorder %s45, 0
      %s48 = sadd.s32 %s47, 1
      %s49 = scalar_select %p46, %s47, %s48
      %p52 = pneg %p46
      %p53 = scmp.eq.s32.totalorder %s11, 1
      %p54 = por %p52, %p53
      %p55 = scmp.ne.s32.totalorder %s47, %s50
      %p56 = scmp.eq.s32.totalorder %s11, 0
      %p57 = por %p55, %p56
      %p58 = scmp.ne.s32.totalorder %s47, %s50
      %p59 = scmp.eq.s32.totalorder %s16, 1
      %p60 = por %p58, %p59
      %p61 = scmp.ne.s32.totalorder %s50, %s51
      %p62 = scmp.eq.s32.totalorder %s16, 0
      %p63 = por %p61, %p62
      %p64 = scmp.ne.s32.totalorder %s50, %s51
      %p65 = scmp.eq.s32.totalorder %s17, 1
      %p66 = por %p64, %p65
      %p68 = scmp.ne.s32.totalorder %s51, %s67
      %p69 = scmp.eq.s32.totalorder %s17, 0
      %p70 = por %p68, %p69
      %s71 = ssub.s32 %s11, %s18
      %p72 = scmp.eq.s32.totalorder %s71, 0
      %s74 = sadd.s32 %s73, 1
      %s75 = scalar_select %p72, %s73, %s74
      %p78 = pneg %p72
      %p79 = scmp.eq.s32.totalorder %s11, 1
      %p80 = por %p78, %p79
      %p81 = scmp.ne.s32.totalorder %s73, %s76
      %p82 = scmp.eq.s32.totalorder %s11, 0
      %p83 = por %p81, %p82
      %p84 = scmp.ne.s32.totalorder %s73, %s76
      %p85 = scmp.eq.s32.totalorder %s16, 1
      %p86 = por %p84, %p85
      %p87 = scmp.ne.s32.totalorder %s76, %s77
      %p88 = scmp.eq.s32.totalorder %s16, 0
      %p89 = por %p87, %p88
      %p90 = scmp.ne.s32.totalorder %s76, %s77
      %p91 = scmp.eq.s32.totalorder %s17, 1
      %p92 = por %p90, %p91
      %p94 = scmp.ne.s32.totalorder %s77, %s93
      %p95 = scmp.eq.s32.totalorder %s17, 0
      %p96 = por %p94, %p95
      %p97 = scmp.le.s32.totalorder 1, %s11
      %p98 = scmp.lt.s32.totalorder %s11, 3
      %p99 = pnand %p97, %p98
      %p100 = pneg %p99
      // Predicated region
      $region9: #{tpu_custom_call.1} parent=5 // pred_check
        _
      $region10: #{tpu_custom_call.1} parent=5 // pred_check_branch
        %102 = sbr.rel (%p99) target = $region12
      $region11: #{tpu_custom_call.1} parent=5 // pred_region
        %s103 = ssub.s32 %s11, 1
      $region12: #{tpu_custom_call.1} parent=5 // pred_fallthru
        _
      %p104 = scmp.lt.s32.totalorder %s11, 2
      // Predicated region
      $region13: #{tpu_custom_call.1} parent=5 // pred_check
        %p105 = pneg %p104
      $region14: #{tpu_custom_call.1} parent=5 // pred_check_branch
        %107 = sbr.rel (%p105) target = $region16
      $region15: #{tpu_custom_call.1} parent=5 // pred_region
        // Predicated region
        $region17: #{tpu_custom_call.1} parent=15 // pred_check
          %p108 = pneg %p31
        $region18: #{tpu_custom_call.1} parent=15 // pred_check_branch
          %110 = sbr.rel (%p108) target = $region20
        $region19: #{tpu_custom_call.1} parent=15 // pred_region
          %p111 = scmp.lt.s32.totalorder %s11, 1
          %s112 = scalar_select %p111, %s11, 1
          %s113 = smul.addr %s112, 8
          %s114 = scalar_lea.vmem %s0, %s113
        $region20: #{tpu_custom_call.1} parent=15 // pred_fallthru
          _
        // Predicated region
        $region21: #{tpu_custom_call.1} parent=15 // pred_check
          %p115 = pneg %p57
        $region22: #{tpu_custom_call.1} parent=15 // pred_check_branch
          %117 = sbr.rel (%p115) target = $region24
        $region23: #{tpu_custom_call.1} parent=15 // pred_region
          %p118 = scmp.lt.s32.totalorder %s11, 1
          %s119 = scalar_select %p118, %s11, 1
          %s120 = smul.addr %s119, 8
          %s121 = scalar_lea.vmem %s1, %s120
        $region24: #{tpu_custom_call.1} parent=15 // pred_fallthru
          _
      $region16: #{tpu_custom_call.1} parent=5 // pred_fallthru
        _
      %p122 = scmp.le.s32.totalorder 1, %s11
      %p123 = scmp.lt.s32.totalorder %s11, 3
      %p124 = pnand %p122, %p123
      %p125 = pneg %p124
      // Predicated region
      $region25: #{tpu_custom_call.1} parent=5 // pred_check
        _
      $region26: #{tpu_custom_call.1} parent=5 // pred_check_branch
        %127 = sbr.rel (%p124) target = $region28
      $region27: #{tpu_custom_call.1} parent=5 // pred_region
        %s128 = ssub.s32 %s11, 1
        %p129 = scmp.lt.s32.totalorder %s16, 1
        %s130 = scalar_select %p129, %s16, 1
        %s131 = smul.addr %s130, 8
        %s132 = scalar_lea.vmem %s0, %s131
        %p133 = pneg %p37
        %p134 = pneg %p34
        %p135 = scmp.lt.s32.totalorder %s16, 1
        %s136 = scalar_select %p135, %s16, 1
        %s137 = smul.addr %s136, 8
        %s138 = scalar_lea.vmem %s1, %s137
        %p139 = pneg %p63
        %p140 = pneg %p60
        %p141 = pneg %p89
        %p142 = pneg %p86
        %s143 = sand.u32 %s76, 1
        %s144 = scalar_lea.sflag [#allocation3], %s143
        %s145 = sand.u32 %s76, 1
        %s146 = smul.addr %s145, 8
        %s147 = scalar_lea.vmem [#allocation2], %s146
        %p148 = scmp.lt.s32.totalorder %s16, 1
        %s149 = scalar_select %p148, %s16, 1
        %s150 = smul.addr %s149, 8
        %s151 = scalar_lea.vmem %s0, %s150
        %p152 = scmp.lt.s32.totalorder %s16, 1
        %s153 = scalar_select %p152, %s16, 1
        %s154 = smul.addr %s153, 8
        %s155 = scalar_lea.vmem %s1, %s154
        %v156 = vld [vmem:[%s151] sm:$0xff]
        %157 = vadd.xlane.f32.xlu0 %v156
        %v158 = vpop.xlane.xlu0 %157
        %v159 = vrot.slane %v158, 4
        %v160 = vadd.f32 %v158, %v159
        %v161 = vrot.slane %v160, 2
        %v162 = vadd.f32 %v160, %v161
        %v163 = vrot.slane %v162, 1
        %v164 = vadd.f32 %v162, %v163
        %s165 = vtos %v164
        %v166 = vstv %s165
        %v167 = vmul.f32 %v166, 0.0009765625
        %v168 = vsub.f32 %v156, %v167
        %v169 = vmul.f32 %v168, %v168
        %170 = vadd.xlane.f32.xlu0 %v169
        %v171 = vpop.xlane.xlu0 %170
        %v172 = vrot.slane %v171, 4
        %v173 = vadd.f32 %v171, %v172
        %v174 = vrot.slane %v173, 2
        %v175 = vadd.f32 %v173, %v174
        %v176 = vrot.slane %v175, 1
        %v177 = vadd.f32 %v175, %v176
        %s178 = vtos %v177
        %v179 = vstv %s178
        %v180 = vmul.f32 %v167, %v167
        %v181 = vmul.f32 %v180, 0.0
        %v182 = vsub.f32 %v179, %v181
        %v183 = vmul.f32 %v182, 0.0009765625
        %v184 = vmax.f32 %v183, 0.0
        %v185 = vadd.f32 %v184, 1e-05
        %v186 = vrsqrt.pop %v185
        %v187 = vld [vmem:[%s155] sm:$0xff]
        %v188 = vmul.f32 %v187, %v186
        %190 = vset.pattern.permute.xlu0 0
        %191 = vperm.xlu0 %190, %v188
        %v192 = vpop.permute.xlu0 %191
        %v194 = vmul.f32 %v168, %v192
        %196 = vset.pattern.permute.xlu0 1
        %197 = vperm.xlu0 %196, %v187
        %v198 = vpop.permute.xlu0 %197
        %v200 = vadd.f32 %v194, %v198
        %201 = vst [vmem:[%s147] sm:$0xff] %v200
        %s202 = sand.u32 %s76, 1
        %s203 = scalar_lea.sflag [#allocation3], %s202
        %s204 = sand.u32 %s76, 1
        %s205 = smul.addr %s204, 8
        %s206 = scalar_lea.vmem [#allocation2], %s205
        // Predicated region
        $region29: #{tpu_custom_call.1} parent=27 // pred_check
          %p207 = pneg %p86
        $region30: #{tpu_custom_call.1} parent=27 // pred_check_branch
          %209 = sbr.rel (%p207) target = $region32
        $region31: #{tpu_custom_call.1} parent=27 // pred_region
          %s211 = ssub.s32 128, 128
          %212 = vsyncadd %s203, %s211
          %s213 = smul.addr %s16, 128
          %s214 = scalar_lea.hbm %s2, %s213
          %s216 = sshll.u32 %s206, 4
          %s217 = int_to_ptr.vmem [resolvable:$true] %s216
          %219 = dma.vmem_to_hbm [thread:$0]  %s217, 128, %s214, %s203
        $region32: #{tpu_custom_call.1} parent=27 // pred_fallthru
          _
      $region28: #{tpu_custom_call.1} parent=5 // pred_fallthru
        _
      %p220 = scmp.le.s32.totalorder 2, %s11
      // Predicated region
      $region33: #{tpu_custom_call.1} parent=5 // pred_check
        %p221 = pneg %p220
      $region34: #{tpu_custom_call.1} parent=5 // pred_check_branch
        %223 = sbr.rel (%p221) target = $region36
      $region35: #{tpu_custom_call.1} parent=5 // pred_region
        %s224 = ssub.s32 %s11, 2
        // Predicated region
        $region37: #{tpu_custom_call.1} parent=35 // pred_check
          %p225 = pneg %p92
        $region38: #{tpu_custom_call.1} parent=35 // pred_check_branch
          %227 = sbr.rel (%p225) target = $region40
        $region39: #{tpu_custom_call.1} parent=35 // pred_region
          %s228 = sand.u32 %s77, 1
          %s229 = scalar_lea.sflag [#allocation3], %s228
          %s230 = sand.u32 %s77, 1
          %s231 = smul.addr %s230, 8
          %s232 = scalar_lea.vmem [#allocation2], %s231
          %233 = dma.done %s229, 128
        $region40: #{tpu_custom_call.1} parent=35 // pred_fallthru
          _
      $region36: #{tpu_custom_call.1} parent=5 // pred_fallthru
        _
    $region6: #{tpu_custom_call.1} parent=1 // loop_footer
      %s15 = sadd.s32 1, %s11
    $region7: #{tpu_custom_call.1} parent=1 // loop_footer_branch
      %10 = sbr.rel target = $region3
    $region8: #{tpu_custom_call.1} parent=1 // loop_exit
      _
    %234 = vsyncpa [#allocation3], 1
    %s235 = scalar_lea.sflag [#allocation3], 1
    %236 = vsyncpa %s235, 1

</llo_original>
